<compile_context>
chip_gen: v7x
topology: tpu7x:2x2x1
jax: 0.10.0
libtpu: 0.0.40
codegen_flags: <defaults>
</compile_context>

<pallas_src>
import functools

import jax
import jax.numpy as jnp
from jax.experimental import pallas as pl
from jax.experimental.pallas import tpu as pltpu


def _round_up(x, m):
    return ((x + m - 1) // m) * m


# ---------------------------------------------------------------------------
# Kernels
# ---------------------------------------------------------------------------

def _fused_kernel(x_ref, w_ref, b_ref, base_ref, affect_ref, *, d_inner):
    """d_inner % 128 == 0: one fused MXU matmul, lane-aligned column split."""
    # x_ref:      (tm, d_model)          pipelined row tile
    # w_ref:      (d_model, 2*d_inner)   VMEM-resident [W_base | W_affect]
    # b_ref:      (1, 2*d_inner)         VMEM-resident [b_base | b_affect]
    # base_ref:   (tm, d_inner)          lane-dense output (identity)
    # affect_ref: (tm, d_inner)          lane-dense output (tanh)
    x = x_ref[...]
    y = jnp.dot(x, w_ref[...], preferred_element_type=jnp.float32)
    y = y + b_ref[...].astype(jnp.float32)
    base_ref[...] = y[:, :d_inner].astype(base_ref.dtype)              # 128-aligned slice
    affect_ref[...] = jnp.tanh(y[:, d_inner:]).astype(affect_ref.dtype)


def _split_kernel(x_ref, wb_ref, bb_ref, wa_ref, ba_ref, base_ref, affect_ref):
    """General d_inner: two matmuls, no sub-128-lane slicing inside the kernel."""
    x = x_ref[...]
    base = jnp.dot(x, wb_ref[...], preferred_element_type=jnp.float32)
    base = base + bb_ref[...].astype(jnp.float32)
    affect = jnp.dot(x, wa_ref[...], preferred_element_type=jnp.float32)
    affect = affect + ba_ref[...].astype(jnp.float32)
    base_ref[...] = base.astype(base_ref.dtype)
    affect_ref[...] = jnp.tanh(affect).astype(affect_ref.dtype)        # tanh only on affect


# ---------------------------------------------------------------------------
# Wrapper helpers
# ---------------------------------------------------------------------------

def _vmem_limit_bytes():
    """Generation-aware scoped-VMEM limit (v7x has 64 MiB/TC, v5e/v6e 128 MiB)."""
    cap = None
    try:
        cap = getattr(pltpu.get_tpu_info(), "vmem_capacity_bytes", None)
    except Exception:
        cap = None
    if not cap:
        cap = 64 * 1024 * 1024          # conservative default: assume v7x
    return min((cap * 3) // 4, 100 * 1024 * 1024)


def _choose_tm(M, per_row_bytes, resident_bytes, *, budget_bytes, row_align,
               tm_max=1024):
    """Pick the row tile: fit VMEM, bound padding, guarantee >=2 grid steps."""
    avail = budget_bytes - resident_bytes
    if avail < row_align * per_row_bytes:
        return None                      # resident weights don't fit -> fallback
    tm = tm_max
    while tm > row_align and tm * per_row_bytes > avail:
        tm //= 2
    tm = max(row_align, tm)
    steps = pl.cdiv(M, tm)
    # >= 2 steps so ("parallel",) can shard rows across the 2 TCs of a v7x chip
    # (costs only ~0.35 us extra on single-TC v5e/v6e).
    if steps < 2 and M >= 2 * row_align:
        steps = 2
    # Prefer an even step count on larger problems (balanced 2-TC sharding).
    if steps > 2 and steps % 2 == 1 and M >= 1024:
        steps += 1
    # Re-derive tm from the step count: padded rows are bounded by
    # row_align-1 per step (and the ragged last tile is handled in-kernel by
    # Pallas' masked boundary blocks -- no wrapper jnp.pad copy of x).
    tm = _round_up(pl.cdiv(M, steps), row_align)
    return min(tm, tm_max)


def _reference_forward(enc_output, w_base, b_base, w_affect, b_affect):
    base = jnp.einsum("bld,di->bli", enc_output, w_base) + b_base
    affect = jnp.tanh(jnp.einsum("bld,di->bli", enc_output, w_affect) + b_affect)
    return affect, base


def score_encode_forward(enc_output, w_base, b_base, w_affect, b_affect,
                         *, tm=None, buffers=None, min_pallas_rows=64):
    """Forward pass of score_encode: returns (affect, base).

    Weights are in (d_model, d_inner) layout (already transposed from
    PyTorch's nn.Linear (d_inner, d_model) weight).  `buffers` optionally sets
    the pipeline depth (pl.Buffered) for the activation/output specs.
    """
    B, L, d_model = enc_output.shape
    d_inner = w_base.shape[1]
    M = B * L

    in_dt = jnp.dtype(enc_output.dtype)
    out_dt = in_dt
    w_dt = jnp.dtype(w_base.dtype)
    row_align = {4: 8, 2: 16, 1: 32}.get(in_dt.itemsize, 8)

    limit = _vmem_limit_bytes()
    budget = limit - 8 * 1024 * 1024                 # headroom for compiler scratch
    nbuf = 2 if buffers is None else buffers
    per_row = nbuf * d_model * in_dt.itemsize + nbuf * 2 * d_inner * out_dt.itemsize
    resident = (2 * d_model * d_inner + 2 * d_inner) * w_dt.itemsize

    if tm is None:
        tm = (_choose_tm(M, per_row, resident, budget_bytes=budget,
                         row_align=row_align)
              if M >= min_pallas_rows else None)

    if tm is None:
        # Tiny problem (pallas_call overhead dominates) or weights exceed the
        # VMEM budget: plain XLA path.
        return _reference_forward(enc_output, w_base, b_base, w_affect, b_affect)

    grid = (pl.cdiv(M, tm),)
    x = enc_output.reshape(M, d_model)               # contiguous, free

    vmem_resident = pl.BlockSpec(memory_space=pltpu.MemorySpace.VMEM)
    if d_inner % 128 == 0:
        kernel = functools.partial(_fused_kernel, d_inner=d_inner)
        w_cat = jnp.concatenate([w_base, w_affect], axis=1)
        b_cat = jnp.concatenate([b_base, b_affect], axis=0).reshape(1, 2 * d_inner)
        operands = (x, w_cat, b_cat)
        weight_specs = [vmem_resident, vmem_resident]
    else:
        kernel = _split_kernel
        operands = (x, w_base, b_base.reshape(1, d_inner),
                    w_affect, b_affect.reshape(1, d_inner))
        weight_specs = [vmem_resident] * 4

    if buffers is None:
        x_spec = pl.BlockSpec((tm, d_model), lambda i: (i, 0))
        out_spec = pl.BlockSpec((tm, d_inner), lambda i: (i, 0))
    else:
        x_spec = pl.BlockSpec((tm, d_model), lambda i: (i, 0),
                              pipeline_mode=pl.Buffered(buffers))
        out_spec = pl.BlockSpec((tm, d_inner), lambda i: (i, 0),
                                pipeline_mode=pl.Buffered(buffers))

    m_eff = grid[0] * tm
    cost = pl.CostEstimate(
        flops=2 * m_eff * d_model * 2 * d_inner,
        transcendentals=m_eff * d_inner,             # tanh only on the affect half
        bytes_accessed=(m_eff * d_model * in_dt.itemsize
                        + 2 * m_eff * d_inner * out_dt.itemsize
                        + resident),
    )

    base2d, affect2d = pl.pallas_call(
        kernel,
        out_shape=(jax.ShapeDtypeStruct((M, d_inner), out_dt),
                   jax.ShapeDtypeStruct((M, d_inner), out_dt)),
        grid_spec=pltpu.PrefetchScalarGridSpec(
            num_scalar_prefetch=0,
            grid=grid,
            in_specs=[x_spec] + weight_specs,
            out_specs=(out_spec, out_spec),
        ),
        compiler_params=pltpu.CompilerParams(
            dimension_semantics=("parallel",),
            vmem_limit_bytes=limit,
        ),
        cost_estimate=cost,
    )(*operands)

    # Outputs are already in final (row-major, lane-dense) layout.
    base = base2d.reshape(B, L, d_inner)
    affect = affect2d.reshape(B, L, d_inner)
    return affect, base


# ---------------------------------------------------------------------------
# Demo / correctness check
# ---------------------------------------------------------------------------

if __name__ == "__main__":
    key = jax.random.PRNGKey(0)

    def make_case(k, B, L, d_model, d_inner):
        k_x, k_wb, k_bb, k_wa, k_ba = jax.random.split(k, 5)
        bound = 1.0 / (d_model ** 0.5)   # PyTorch-Linear-like init scale
        enc = jax.random.normal(k_x, (B, L, d_model), jnp.float32)
        wb = jax.random.uniform(k_wb, (d_model, d_inner), jnp.float32, -bound, bound)
        bb = jax.random.uniform(k_bb, (d_inner,), jnp.float32, -bound, bound)
        wa = jax.random.uniform(k_wa, (d_model, d_inner), jnp.float32, -bound, bound)
        ba = jax.random.uniform(k_ba, (d_inner,), jnp.float32, -bound, bound)
        return enc, wb, bb, wa, ba

    k1, k2 = jax.random.split(key)
    cases = [
        # 128-aligned d_inner -> fused kernel with lane-aligned column split.
        ("fused", make_case(k1, 2, 64, 128, 128)),
        # Non-aligned d_inner -> split kernel (two matmuls, no sub-lane slicing).
        ("split", make_case(k2, 2, 64, 32, 64)),
    ]

    for name, (enc, wb, bb, wa, ba) in cases:
        affect, base = score_encode_forward(enc, wb, bb, wa, ba)
        jax.block_until_ready((affect, base))

        affect_ref, base_ref = _reference_forward(enc, wb, bb, wa, ba)
        assert affect.shape == affect_ref.shape, name
        assert base.shape == base_ref.shape, name
        assert jnp.allclose(base, base_ref, atol=2e-4, rtol=1e-4), name
        assert jnp.allclose(affect, affect_ref, atol=2e-4, rtol=1e-4), name

    print("KERNEL_OK")
</pallas_src>

<mosaic_0001>
module attributes {stable_mosaic.version = 11 : i64} {
  func.func @_fused_kernel(%arg0: i32, %arg1: memref<64x128xf32, #tpu.memory_space<vmem>>, %arg2: memref<128x256xf32, #tpu.memory_space<vmem>>, %arg3: memref<1x256xf32, #tpu.memory_space<vmem>>, %arg4: memref<64x128xf32, #tpu.memory_space<vmem>>, %arg5: memref<64x128xf32, #tpu.memory_space<vmem>>) attributes {dimension_semantics = [#tpu.dimension_semantics<parallel>], iteration_bounds = array<i64: 2>, scalar_prefetch = 0 : i64, scratch_operands = 0 : i64, tpu.core_type = #tpu.core_type<tc>, window_params = [{transform_indices = @transform_0, window_bounds = array<i64: 64, 128>}, {pipeline_mode = #tpu.pipeline_mode<synchronous>, transform_indices = @transform_1, window_bounds = array<i64: 128, 256>}, {pipeline_mode = #tpu.pipeline_mode<synchronous>, transform_indices = @transform_2, window_bounds = array<i64: 1, 256>}, {transform_indices = @transform_3, window_bounds = array<i64: 64, 128>}, {transform_indices = @transform_4, window_bounds = array<i64: 64, 128>}]} {
    %c0 = arith.constant 0 : index
    %c0_0 = arith.constant 0 : index
    %0 = vector.load %arg1[%c0, %c0_0] : memref<64x128xf32, #tpu.memory_space<vmem>>, vector<64x128xf32>
    %c0_1 = arith.constant 0 : index
    %c0_2 = arith.constant 0 : index
    %1 = vector.load %arg2[%c0_1, %c0_2] : memref<128x256xf32, #tpu.memory_space<vmem>>, vector<128x256xf32>
    %cst = arith.constant dense<0.000000e+00> : vector<64x256xf32>
    %2 = tpu.matmul %0, %1, %cst {dimension_numbers = #tpu.dot_dimension_numbers<[1], [0], [0], [1], [0, 0, 1, 1], [], []>} : vector<64x128xf32>, vector<128x256xf32>, vector<64x256xf32> -> vector<64x256xf32>
    %c0_3 = arith.constant 0 : index
    %c0_4 = arith.constant 0 : index
    %3 = vector.load %arg3[%c0_3, %c0_4] : memref<1x256xf32, #tpu.memory_space<vmem>>, vector<1x256xf32>
    %4 = vector.broadcast %3 : vector<1x256xf32> to vector<64x256xf32>
    %5 = arith.addf %2, %4 : vector<64x256xf32>
    %6 = vector.extract_strided_slice %5 {offsets = [0, 0], sizes = [64, 128], strides = [1, 1]} : vector<64x256xf32> to vector<64x128xf32>
    %c0_5 = arith.constant 0 : index
    %c0_6 = arith.constant 0 : index
    %7 = vector.load %arg4[%c0_5, %c0_6] : memref<64x128xf32, #tpu.memory_space<vmem>>, vector<64x128xf32>
    tpu.vector_store %arg4[%c0_5, %c0_6], %6 {strides = array<i32>} : memref<64x128xf32, #tpu.memory_space<vmem>>, vector<64x128xf32>,
    %8 = vector.extract_strided_slice %5 {offsets = [0, 128], sizes = [64, 128], strides = [1, 1]} : vector<64x256xf32> to vector<64x128xf32>
    %9 = math.tanh %8 : vector<64x128xf32>
    %c0_7 = arith.constant 0 : index
    %c0_8 = arith.constant 0 : index
    %10 = vector.load %arg5[%c0_7, %c0_8] : memref<64x128xf32, #tpu.memory_space<vmem>>, vector<64x128xf32>
    tpu.vector_store %arg5[%c0_7, %c0_8], %9 {strides = array<i32>} : memref<64x128xf32, #tpu.memory_space<vmem>>, vector<64x128xf32>,
    return
  }
  func.func @transform_0(%arg0: i32) -> (i32, i32) {
    %c0_i32 = arith.constant 0 : i32
    %c0_i32_0 = arith.constant 0 : i32
    return %arg0, %c0_i32 : i32, i32
  }
  func.func @transform_1(%arg0: i32) -> (i32, i32) {
    %c0_i32 = arith.constant 0 : i32
    %c0_i32_0 = arith.constant 0 : i32
    %c0_i32_1 = arith.constant 0 : i32
    return %c0_i32, %c0_i32_0 : i32, i32
  }
  func.func @transform_2(%arg0: i32) -> (i32, i32) {
    %c0_i32 = arith.constant 0 : i32
    %c0_i32_0 = arith.constant 0 : i32
    %c0_i32_1 = arith.constant 0 : i32
    return %c0_i32, %c0_i32_0 : i32, i32
  }
  func.func @transform_3(%arg0: i32) -> (i32, i32) {
    %c0_i32 = arith.constant 0 : i32
    %c0_i32_0 = arith.constant 0 : i32
    return %arg0, %c0_i32 : i32, i32
  }
  func.func @transform_4(%arg0: i32) -> (i32, i32) {
    %c0_i32 = arith.constant 0 : i32
    %c0_i32_0 = arith.constant 0 : i32
    return %arg0, %c0_i32 : i32, i32
  }
}

</mosaic_0001>

<llo_original>
// kernel: tpu_custom_call.1
$region0: #{tpu_custom_call.1}
  #allocation0 [shape = 'u32[]', space=smem, size = 0x4, offset = 0x4, fixed_abs, tag = 'smem constant byte address 0x4 - core index']
  #allocation1 [shape = 'u32[144,128]{1,0:T(1,128)}', space=vmem, size = 0x12000, scoped, tag = 'internal scratch']
  %s0 = inlined_call_operand.hbm [shape: f32[128,128], index: 0, kind: input, shape index: {}]
  %s1 = inlined_call_operand.hbm [shape: f32[128,256], index: 1, kind: input, shape index: {}]
  %s2 = inlined_call_operand.vmem [shape: f32[1,256], index: 2, kind: input, shape index: {}]
  %s3 = inlined_call_operand.hbm [shape: f32[128,128], index: 3, kind: output, shape index: {0}]
  %s4 = inlined_call_operand.hbm [shape: f32[128,128], index: 4, kind: output, shape index: {1}]
  %5 = xla_tuple %s3, %s4
  %s6 = sld [smem:[#allocation0]]
  $region61: #{tpu_custom_call.1} parent=0
    _
  %s8 = ssub.s32 1, %s6
  %s9 = scalar_select 0, %s8, %s6
  $region1: #{tpu_custom_call.1} parent=0
    #allocation2 [shape = 'u8[65536]{0}', space=vmem, size = 0x10000, scoped, tag = 'input window, operand 0']
    #allocation3 [shape = 's32[2]{0}', space=sflag, size = 0x8, scoped, tag = 'scoped memory for tpu_custom_call.1']
    #allocation4 [shape = 's32[2]{0}', space=sflag, size = 0x8, scoped, tag = 'scoped memory for tpu_custom_call.1']
    #allocation5 [shape = 'u8[131072]{0}', space=vmem, size = 0x20000, scoped, tag = 'input window, operand 1, single buffered']
    #allocation6 [shape = 's32[1]{0}', space=sflag, size = 0x4, scoped, tag = 'scoped memory for tpu_custom_call.1']
    #allocation7 [shape = 'u8[65536]{0}', space=vmem, size = 0x10000, scoped, tag = 'output window, operand 0']
    #allocation8 [shape = 'u8[65536]{0}', space=vmem, size = 0x10000, scoped, tag = 'output window, operand 1']
    #allocation9 [shape = 's32[2]{0}', space=sflag, size = 0x8, scoped, tag = 'scoped memory for tpu_custom_call.1']
    %10 = vsyncpa [#allocation3], 0
    %s11 = scalar_lea.sflag [#allocation3], 1
    %12 = vsyncpa %s11, 0
    %13 = vsyncpa [#allocation6], 0
    %14 = vsyncpa [#allocation4], 0
    %s15 = scalar_lea.sflag [#allocation4], 1
    %16 = vsyncpa %s15, 0
    %17 = vsyncpa [#allocation9], 0
    %s18 = scalar_lea.sflag [#allocation9], 1
    %19 = vsyncpa %s18, 0
    loop: start=0, step=1, limit=4
    $region2: #{tpu_custom_call.1} parent=1 // loop_pre_header
      _
    $region3: #{tpu_custom_call.1} parent=1 // loop_header
      %s21 = sphi 0, %s25
      %p22 = scmp.ge.s32.totalorder %s21, 4
      %s31 = sphi 0, %s33
      %s34 = sphi 0, %s31
      %s35 = sphi 0, %s34
      %s51 = sphi 0, %s35
      %s55 = sphi 0, %s55
      %s57 = sphi 0, %s55
      %s58 = sphi 0, %s57
      %s72 = sphi 0, %s58
      %s76 = sphi 0, %s76
      %s78 = sphi 0, %s76
      %s79 = sphi 0, %s78
      %s93 = sphi 0, %s79
      %s99 = sphi 0, %s101
      %s102 = sphi 0, %s99
      %s103 = sphi 0, %s102
      %s119 = sphi 0, %s103
      %s125 = sphi 0, %s127
      %s128 = sphi 0, %s125
      %s129 = sphi 0, %s128
      %s145 = sphi 0, %s129
    $region4: #{tpu_custom_call.1} parent=1 // loop_header_branch
      %24 = sbr.rel (%p22) target = $region8
    $region5: #{tpu_custom_call.1} parent=1 // loop_body
      %s26 = ssub.s32 %s21, 1
      %s27 = ssub.s32 %s21, 2
      %s28 = sadd.s32 %s21, 1
      %s29 = ssub.s32 %s21, %s28
      %p30 = scmp.eq.s32.totalorder %s29, 0
      %s32 = sadd.s32 %s31, 1
      %s33 = scalar_select %p30, %s31, %s32
      %p36 = pneg %p30
      %p37 = scmp.eq.s32.totalorder %s21, 1
      %p38 = por %p36, %p37
      %p39 = scmp.ne.s32.totalorder %s31, %s34
      %p40 = scmp.eq.s32.totalorder %s21, 0
      %p41 = por %p39, %p40
      %p42 = scmp.ne.s32.totalorder %s31, %s34
      %p43 = scmp.eq.s32.totalorder %s26, 1
      %p44 = por %p42, %p43
      %p45 = scmp.ne.s32.totalorder %s34, %s35
      %p46 = scmp.eq.s32.totalorder %s26, 0
      %p47 = por %p45, %p46
      %p48 = scmp.ne.s32.totalorder %s34, %s35
      %p49 = scmp.eq.s32.totalorder %s27, 1
      %p50 = por %p48, %p49
      %p52 = scmp.ne.s32.totalorder %s35, %s51
      %p53 = scmp.eq.s32.totalorder %s27, 0
      %p54 = por %p52, %p53
      %s56 = sadd.s32 %s55, 1
      %p59 = scmp.eq.s32.totalorder %s21, 1
      %p60 = scmp.ne.s32.totalorder %s55, %s57
      %p61 = scmp.eq.s32.totalorder %s21, 0
      %p62 = por %p60, %p61
      %p63 = scmp.ne.s32.totalorder %s55, %s57
      %p64 = scmp.eq.s32.totalorder %s26, 1
      %p65 = por %p63, %p64
      %p66 = scmp.ne.s32.totalorder %s57, %s58
      %p67 = scmp.eq.s32.totalorder %s26, 0
      %p68 = por %p66, %p67
      %p69 = scmp.ne.s32.totalorder %s57, %s58
      %p70 = scmp.eq.s32.totalorder %s27, 1
      %p71 = por %p69, %p70
      %p73 = scmp.ne.s32.totalorder %s58, %s72
      %p74 = scmp.eq.s32.totalorder %s27, 0
      %p75 = por %p73, %p74
      %s77 = sadd.s32 %s76, 1
      %p80 = scmp.eq.s32.totalorder %s21, 1
      %p81 = scmp.ne.s32.totalorder %s76, %s78
      %p82 = scmp.eq.s32.totalorder %s21, 0
      %p83 = por %p81, %p82
      %p84 = scmp.ne.s32.totalorder %s76, %s78
      %p85 = scmp.eq.s32.totalorder %s26, 1
      %p86 = por %p84, %p85
      %p87 = scmp.ne.s32.totalorder %s78, %s79
      %p88 = scmp.eq.s32.totalorder %s26, 0
      %p89 = por %p87, %p88
      %p90 = scmp.ne.s32.totalorder %s78, %s79
      %p91 = scmp.eq.s32.totalorder %s27, 1
      %p92 = por %p90, %p91
      %p94 = scmp.ne.s32.totalorder %s79, %s93
      %p95 = scmp.eq.s32.totalorder %s27, 0
      %p96 = por %p94, %p95
      %s97 = ssub.s32 %s21, %s28
      %p98 = scmp.eq.s32.totalorder %s97, 0
      %s100 = sadd.s32 %s99, 1
      %s101 = scalar_select %p98, %s99, %s100
      %p104 = pneg %p98
      %p105 = scmp.eq.s32.totalorder %s21, 1
      %p106 = por %p104, %p105
      %p107 = scmp.ne.s32.totalorder %s99, %s102
      %p108 = scmp.eq.s32.totalorder %s21, 0
      %p109 = por %p107, %p108
      %p110 = scmp.ne.s32.totalorder %s99, %s102
      %p111 = scmp.eq.s32.totalorder %s26, 1
      %p112 = por %p110, %p111
      %p113 = scmp.ne.s32.totalorder %s102, %s103
      %p114 = scmp.eq.s32.totalorder %s26, 0
      %p115 = por %p113, %p114
      %p116 = scmp.ne.s32.totalorder %s102, %s103
      %p117 = scmp.eq.s32.totalorder %s27, 1
      %p118 = por %p116, %p117
      %p120 = scmp.ne.s32.totalorder %s103, %s119
      %p121 = scmp.eq.s32.totalorder %s27, 0
      %p122 = por %p120, %p121
      %s123 = ssub.s32 %s21, %s28
      %p124 = scmp.eq.s32.totalorder %s123, 0
      %s126 = sadd.s32 %s125, 1
      %s127 = scalar_select %p124, %s125, %s126
      %p130 = pneg %p124
      %p131 = scmp.eq.s32.totalorder %s21, 1
      %p132 = por %p130, %p131
      %p133 = scmp.ne.s32.totalorder %s125, %s128
      %p134 = scmp.eq.s32.totalorder %s21, 0
      %p135 = por %p133, %p134
      %p136 = scmp.ne.s32.totalorder %s125, %s128
      %p137 = scmp.eq.s32.totalorder %s26, 1
      %p138 = por %p136, %p137
      %p139 = scmp.ne.s32.totalorder %s128, %s129
      %p140 = scmp.eq.s32.totalorder %s26, 0
      %p141 = por %p139, %p140
      %p142 = scmp.ne.s32.totalorder %s128, %s129
      %p143 = scmp.eq.s32.totalorder %s27, 1
      %p144 = por %p142, %p143
      %p146 = scmp.ne.s32.totalorder %s129, %s145
      %p147 = scmp.eq.s32.totalorder %s27, 0
      %p148 = por %p146, %p147
      %p149 = scmp.le.s32.totalorder 1, %s21
      %p150 = scmp.lt.s32.totalorder %s21, 3
      %p151 = pnand %p149, %p150
      %p152 = pneg %p151
      // Predicated region
      $region9: #{tpu_custom_call.1} parent=5 // pred_check
        _
      $region10: #{tpu_custom_call.1} parent=5 // pred_check_branch
        %154 = sbr.rel (%p151) target = $region12
      $region11: #{tpu_custom_call.1} parent=5 // pred_region
        %s155 = ssub.s32 %s21, 1
        // Predicated region
        $region13: #{tpu_custom_call.1} parent=11 // pred_check
          %p156 = pneg %p68
        $region14: #{tpu_custom_call.1} parent=11 // pred_check_branch
          %158 = sbr.rel (%p156) target = $region16
        $region15: #{tpu_custom_call.1} parent=11 // pred_region
          %s160 = ssub.s32 4096, 4096
          %161 = vsyncadd [#allocation6], %s160
          %s162 = sshll.u32 [#allocation5], 4
          %s163 = int_to_ptr.vmem [resolvable:$true] %s162
          %168 = dma.hbm_to_vmem [thread:$0]  %s1, 4096, %s163, [#allocation6], 256, 256, 16
        $region16: #{tpu_custom_call.1} parent=11 // pred_fallthru
          _
        // Predicated region
        $region17: #{tpu_custom_call.1} parent=11 // pred_check
          %p169 = pneg %p89
        $region18: #{tpu_custom_call.1} parent=11 // pred_check_branch
          %171 = sbr.rel (%p169) target = $region20
        $region19: #{tpu_custom_call.1} parent=11 // pred_region
          _
        $region20: #{tpu_custom_call.1} parent=11 // pred_fallthru
          _
      $region12: #{tpu_custom_call.1} parent=5 // pred_fallthru
        _
      %p172 = scmp.lt.s32.totalorder %s21, 2
      // Predicated region
      $region21: #{tpu_custom_call.1} parent=5 // pred_check
        %p173 = pneg %p172
      $region22: #{tpu_custom_call.1} parent=5 // pred_check_branch
        %175 = sbr.rel (%p173) target = $region24
      $region23: #{tpu_custom_call.1} parent=5 // pred_region
        // Predicated region
        $region25: #{tpu_custom_call.1} parent=23 // pred_check
          %p176 = pneg %p41
        $region26: #{tpu_custom_call.1} parent=23 // pred_check_branch
          %178 = sbr.rel (%p176) target = $region28
        $region27: #{tpu_custom_call.1} parent=23 // pred_region
          %s179 = sand.u32 %s31, 1
          %s180 = scalar_lea.sflag [#allocation3], %s179
          %s181 = sand.u32 %s31, 1
          %s182 = smul.addr %s181, 64
          %s183 = scalar_lea.vmem [#allocation2], %s182
          %s184 = smul.u32 8, %s21
          %s186 = ssub.s32 1024, 1024
          %187 = vsyncadd %s180, %s186
          %s188 = smul.addr %s184, 128
          %s189 = scalar_lea.hbm %s0, %s188
          %s190 = sshll.u32 %s183, 4
          %s191 = int_to_ptr.vmem [resolvable:$true] %s190
          %196 = dma.hbm_to_vmem [thread:$0]  %s189, 1024, %s191, %s180, 128, 128, 8
        $region28: #{tpu_custom_call.1} parent=23 // pred_fallthru
          _
      $region24: #{tpu_custom_call.1} parent=5 // pred_fallthru
        _
      %p197 = scmp.le.s32.totalorder 1, %s21
      %p198 = scmp.lt.s32.totalorder %s21, 3
      %p199 = pnand %p197, %p198
      %p200 = pneg %p199
      // Predicated region
      $region29: #{tpu_custom_call.1} parent=5 // pred_check
        _
      $region30: #{tpu_custom_call.1} parent=5 // pred_check_branch
        %202 = sbr.rel (%p199) target = $region32
      $region31: #{tpu_custom_call.1} parent=5 // pred_region
        %s203 = ssub.s32 %s21, 1
        %s204 = sand.u32 %s34, 1
        %s205 = scalar_lea.sflag [#allocation3], %s204
        %s206 = sand.u32 %s34, 1
        %s207 = smul.addr %s206, 64
        %s208 = scalar_lea.vmem [#allocation2], %s207
        // Predicated region
        $region33: #{tpu_custom_call.1} parent=31 // pred_check
          %p209 = pneg %p47
        $region34: #{tpu_custom_call.1} parent=31 // pred_check_branch
          %211 = sbr.rel (%p209) target = $region36
        $region35: #{tpu_custom_call.1} parent=31 // pred_region
          %212 = dma.done %s205, 1024
        $region36: #{tpu_custom_call.1} parent=31 // pred_fallthru
          _
        // Predicated region
        $region37: #{tpu_custom_call.1} parent=31 // pred_check
          %p213 = pneg %p68
        $region38: #{tpu_custom_call.1} parent=31 // pred_check_branch
          %215 = sbr.rel (%p213) target = $region40
        $region39: #{tpu_custom_call.1} parent=31 // pred_region
          %216 = dma.done [#allocation6], 4096
        $region40: #{tpu_custom_call.1} parent=31 // pred_fallthru
          _
        %s217 = sand.u32 %s34, 1
        %s218 = scalar_lea.sflag [#allocation3], %s217
        %s219 = sand.u32 %s34, 1
        %s220 = smul.addr %s219, 64
        %s221 = scalar_lea.vmem [#allocation2], %s220
        %p222 = pneg %p47
        %p223 = pneg %p44
        %p224 = pneg %p68
        %p225 = pneg %p65
        %p226 = pneg %p89
        %p227 = pneg %p86
        %p228 = pneg %p115
        %p229 = pneg %p112
        %s230 = sand.u32 %s102, 1
        %s231 = scalar_lea.sflag [#allocation4], %s230
        %s232 = sand.u32 %s102, 1
        %s233 = smul.addr %s232, 64
        %s234 = scalar_lea.vmem [#allocation7], %s233
        %p235 = pneg %p141
        %p236 = pneg %p138
        %s237 = sand.u32 %s128, 1
        %s238 = scalar_lea.sflag [#allocation9], %s237
        %s239 = sand.u32 %s128, 1
        %s240 = smul.addr %s239, 64
        %s241 = scalar_lea.vmem [#allocation8], %s240
        %s242 = smul.u32 8, %s26
        %s243 = smul.u32 8, %s26
        %s244 = smul.u32 8, %s26
        %v245 = vld [vmem:[%s208] sm:$0xff]
        %v246 = vld [vmem:[%s208 + $0x8] sm:$0xff]
        %v247 = vld [vmem:[%s208 + $0x10] sm:$0xff]
        %v248 = vld [vmem:[%s208 + $0x18] sm:$0xff]
        %v249 = vld [vmem:[%s208 + $0x20] sm:$0xff]
        %v250 = vld [vmem:[%s208 + $0x28] sm:$0xff]
        %v251 = vld [vmem:[%s208 + $0x30] sm:$0xff]
        %v252 = vld [vmem:[%s208 + $0x38] sm:$0xff]
        %v253 = vld [vmem:[#allocation5] sm:$0xff]
        %v254 = vld [vmem:[#allocation5 + $0x8] sm:$0xff]
        %v255 = vld [vmem:[#allocation5 + $0x10] sm:$0xff]
        %v256 = vld [vmem:[#allocation5 + $0x18] sm:$0xff]
        %v257 = vld [vmem:[#allocation5 + $0x20] sm:$0xff]
        %v258 = vld [vmem:[#allocation5 + $0x28] sm:$0xff]
        %v259 = vld [vmem:[#allocation5 + $0x30] sm:$0xff]
        %v260 = vld [vmem:[#allocation5 + $0x38] sm:$0xff]
        %v261 = vld [vmem:[#allocation5 + $0x40] sm:$0xff]
        %v262 = vld [vmem:[#allocation5 + $0x48] sm:$0xff]
        %v263 = vld [vmem:[#allocation5 + $0x50] sm:$0xff]
        %v264 = vld [vmem:[#allocation5 + $0x58] sm:$0xff]
        %v265 = vld [vmem:[#allocation5 + $0x60] sm:$0xff]
        %v266 = vld [vmem:[#allocation5 + $0x68] sm:$0xff]
        %v267 = vld [vmem:[#allocation5 + $0x70] sm:$0xff]
        %v268 = vld [vmem:[#allocation5 + $0x78] sm:$0xff]
        %v269 = vld [vmem:[#allocation5 + $0x80] sm:$0xff]
        %v270 = vld [vmem:[#allocation5 + $0x88] sm:$0xff]
        %v271 = vld [vmem:[#allocation5 + $0x90] sm:$0xff]
        %v272 = vld [vmem:[#allocation5 + $0x98] sm:$0xff]
        %v273 = vld [vmem:[#allocation5 + $0xa0] sm:$0xff]
        %v274 = vld [vmem:[#allocation5 + $0xa8] sm:$0xff]
        %v275 = vld [vmem:[#allocation5 + $0xb0] sm:$0xff]
        %v276 = vld [vmem:[#allocation5 + $0xb8] sm:$0xff]
        %v277 = vld [vmem:[#allocation5 + $0xc0] sm:$0xff]
        %v278 = vld [vmem:[#allocation5 + $0xc8] sm:$0xff]
        %v279 = vld [vmem:[#allocation5 + $0xd0] sm:$0xff]
        %v280 = vld [vmem:[#allocation5 + $0xd8] sm:$0xff]
        %v281 = vld [vmem:[#allocation5 + $0xe0] sm:$0xff]
        %v282 = vld [vmem:[#allocation5 + $0xe8] sm:$0xff]
        %v283 = vld [vmem:[#allocation5 + $0xf0] sm:$0xff]
        %v284 = vld [vmem:[#allocation5 + $0xf8] sm:$0xff]
        %v285 = vld [vmem:[%s2] sm:$0x3]
        %v287 = vlaneseq
        %v288 = vshrl.u32 %v287, 7
        %v289 = vsub.s32 0, %v288
        %v290 = vrot.slane %v285, %v289
        %v291 = vlaneseq
        %v292 = vshrl.u32 %v291, 7
        %v293 = vsub.s32 1, %v292
        %v294 = vrot.slane %v285, %v293
        %297 = vmatprep.subr.mxu0 %v254
        %298 = vmatpush1.msra.mxu0 %v253
        %299 = vmatprep.subr.mxu0 %v256
        %300 = vmatpush1.msra.mxu0 %v255
        %301 = vmatprep.subr.mxu0 %v258
        %302 = vmatpush1.msra.mxu0 %v257
        %303 = vmatprep.subr.mxu0 %v260
        %304 = vmatpush1.msra.mxu0 %v259
        %305 = vmatprep.subr.mxu0 %v262
        %306 = vmatpush1.msra.mxu0 %v261
        %307 = vmatprep.subr.mxu0 %v264
        %308 = vmatpush1.msra.mxu0 %v263
        %309 = vmatprep.subr.mxu0 %v266
        %310 = vmatpush1.msra.mxu0 %v265
        %311 = vmatprep.subr.mxu0 %v268
        %312 = vmatpush1.msra.mxu0 %v267
        %313 = vmatprep.subr.mxu0 %v270
        %314 = vmatpush1.msra.mxu0 %v269
        %315 = vmatprep.subr.mxu0 %v272
        %316 = vmatpush1.msra.mxu0 %v271
        %317 = vmatprep.subr.mxu0 %v274
        %318 = vmatpush1.msra.mxu0 %v273
        %319 = vmatprep.subr.mxu0 %v276
        %320 = vmatpush1.msra.mxu0 %v275
        %321 = vmatprep.subr.mxu0 %v278
        %322 = vmatpush1.msra.mxu0 %v277
        %323 = vmatprep.subr.mxu0 %v280
        %324 = vmatpush1.msra.mxu0 %v279
        %325 = vmatprep.subr.mxu0 %v282
        %326 = vmatpush1.msra.mxu0 %v281
        %327 = vmatprep.subr.mxu0 %v284
        %328 = vmatpush1.msra.mxu0 %v283
        %329 = vmatprep.subr.mxu0 0.0
        %330 = vmatpush1.msra.mxu0 0.0
        %331 = vmatprep.subr.mxu0 0.0
        %332 = vmatpush1.msra.mxu0 0.0
        %333 = vmatprep.subr.mxu0 0.0
        %334 = vmatpush1.msra.mxu0 0.0
        %335 = vmatprep.subr.mxu0 0.0
        %336 = vmatpush1.msra.mxu0 0.0
        %337 = vmatprep.subr.mxu0 0.0
        %338 = vmatpush1.msra.mxu0 0.0
        %339 = vmatprep.subr.mxu0 0.0
        %340 = vmatpush1.msra.mxu0 0.0
        %341 = vmatprep.subr.mxu0 0.0
        %342 = vmatpush1.msra.mxu0 0.0
        %343 = vmatprep.subr.mxu0 0.0
        %344 = vmatpush1.msra.mxu0 0.0
        %345 = vmatprep.subr.mxu0 0.0
        %346 = vmatpush1.msra.mxu0 0.0
        %347 = vmatprep.subr.mxu0 0.0
        %348 = vmatpush1.msra.mxu0 0.0
        %349 = vmatprep.subr.mxu0 0.0
        %350 = vmatpush1.msra.mxu0 0.0
        %351 = vmatprep.subr.mxu0 0.0
        %352 = vmatpush1.msra.mxu0 0.0
        %353 = vmatprep.subr.mxu0 0.0
        %354 = vmatpush1.msra.mxu0 0.0
        %355 = vmatprep.subr.mxu0 0.0
        %356 = vmatpush1.msra.mxu0 0.0
        %357 = vmatprep.subr.mxu0 0.0
        %358 = vmatpush1.msra.mxu0 0.0
        %359 = vmatprep.subr.mxu0 0.0
        %360 = vmatpush1.msra.mxu0 0.0
        %361 = vmatprep.mubr.f32.mxu0 0.0
        %362 = vmatmul.mubr.f32.gmra.mrb[0].mxu0 %v245
        %v363 = vpop.f32.mrb[0].mxu0
        %v364 = vadd.f32 %v290, %v363
        %v365 = vpop.f32.mrb[0].mxu0
        %v366 = vadd.f32 %v294, %v365
        %367 = vmatprep.mubr.f32.mxu0 0.0
        %368 = vmatmul.mubr.f32.gmra.mrb[0].mxu0 %v246
        %v369 = vpop.f32.mrb[0].mxu0
        %v370 = vadd.f32 %v290, %v369
        %v371 = vpop.f32.mrb[0].mxu0
        %v372 = vadd.f32 %v294, %v371
        %373 = vmatprep.mubr.f32.mxu0 0.0
        %374 = vmatmul.mubr.f32.gmra.mrb[0].mxu0 %v247
        %v375 = vpop.f32.mrb[0].mxu0
        %v376 = vadd.f32 %v290, %v375
        %v377 = vpop.f32.mrb[0].mxu0
        %v378 = vadd.f32 %v294, %v377
        %379 = vmatprep.mubr.f32.mxu0 0.0
        %380 = vmatmul.mubr.f32.gmra.mrb[0].mxu0 %v248
        %v381 = vpop.f32.mrb[0].mxu0
        %v382 = vadd.f32 %v290, %v381
        %v383 = vpop.f32.mrb[0].mxu0
        %v384 = vadd.f32 %v294, %v383
        %385 = vmatprep.mubr.f32.mxu0 0.0
        %386 = vmatmul.mubr.f32.gmra.mrb[0].mxu0 %v249
        %v387 = vpop.f32.mrb[0].mxu0
        %v388 = vadd.f32 %v290, %v387
        %v389 = vpop.f32.mrb[0].mxu0
        %v390 = vadd.f32 %v294, %v389
        %391 = vmatprep.mubr.f32.mxu0 0.0
        %392 = vmatmul.mubr.f32.gmra.mrb[0].mxu0 %v250
        %v393 = vpop.f32.mrb[0].mxu0
        %v394 = vadd.f32 %v290, %v393
        %v395 = vpop.f32.mrb[0].mxu0
        %v396 = vadd.f32 %v294, %v395
        %397 = vmatprep.mubr.f32.mxu0 0.0
        %398 = vmatmul.mubr.f32.gmra.mrb[0].mxu0 %v251
        %v399 = vpop.f32.mrb[0].mxu0
        %v400 = vadd.f32 %v290, %v399
        %v401 = vpop.f32.mrb[0].mxu0
        %v402 = vadd.f32 %v294, %v401
        %403 = vmatprep.mubr.f32.mxu0 0.0
        %404 = vmatmul.mubr.f32.gmra.mrb[0].mxu0 %v252
        %v405 = vpop.f32.mrb[0].mxu0
        %v406 = vadd.f32 %v290, %v405
        %v407 = vpop.f32.mrb[0].mxu0
        %v408 = vadd.f32 %v294, %v407
        %409 = vdwg.mxu0
        %410 = vst [vmem:[%s234] sm:$0xff] %v364
        %411 = vst [vmem:[%s234 + $0x8] sm:$0xff] %v370
        %412 = vst [vmem:[%s234 + $0x10] sm:$0xff] %v376
        %413 = vst [vmem:[%s234 + $0x18] sm:$0xff] %v382
        %414 = vst [vmem:[%s234 + $0x20] sm:$0xff] %v388
        %415 = vst [vmem:[%s234 + $0x28] sm:$0xff] %v394
        %416 = vst [vmem:[%s234 + $0x30] sm:$0xff] %v400
        %417 = vst [vmem:[%s234 + $0x38] sm:$0xff] %v406
        %v418 = vtanh.pop %v366
        %v419 = vtanh.pop %v372
        %v420 = vtanh.pop %v378
        %v421 = vtanh.pop %v384
        %v422 = vtanh.pop %v390
        %v423 = vtanh.pop %v396
        %v424 = vtanh.pop %v402
        %v425 = vtanh.pop %v408
        %426 = vst [vmem:[%s241] sm:$0xff] %v418
        %427 = vst [vmem:[%s241 + $0x8] sm:$0xff] %v419
        %428 = vst [vmem:[%s241 + $0x10] sm:$0xff] %v420
        %429 = vst [vmem:[%s241 + $0x18] sm:$0xff] %v421
        %430 = vst [vmem:[%s241 + $0x20] sm:$0xff] %v422
        %431 = vst [vmem:[%s241 + $0x28] sm:$0xff] %v423
        %432 = vst [vmem:[%s241 + $0x30] sm:$0xff] %v424
        %433 = vst [vmem:[%s241 + $0x38] sm:$0xff] %v425
        %s434 = sand.u32 %s102, 1
        %s435 = scalar_lea.sflag [#allocation4], %s434
        %s436 = sand.u32 %s102, 1
        %s437 = smul.addr %s436, 64
        %s438 = scalar_lea.vmem [#allocation7], %s437
        %s439 = sand.u32 %s128, 1
        %s440 = scalar_lea.sflag [#allocation9], %s439
        %s441 = sand.u32 %s128, 1
        %s442 = smul.addr %s441, 64
        %s443 = scalar_lea.vmem [#allocation8], %s442
        // Predicated region
        $region41: #{tpu_custom_call.1} parent=31 // pred_check
          %p444 = pneg %p112
        $region42: #{tpu_custom_call.1} parent=31 // pred_check_branch
          %446 = sbr.rel (%p444) target = $region44
        $region43: #{tpu_custom_call.1} parent=31 // pred_region
          %s447 = smul.u32 8, %s26
          %s449 = ssub.s32 1024, 1024
          %450 = vsyncadd %s435, %s449
          %s451 = smul.addr %s447, 128
          %s452 = scalar_lea.hbm %s3, %s451
          %s453 = sshll.u32 %s438, 4
          %s454 = int_to_ptr.vmem [resolvable:$true] %s453
          %459 = dma.vmem_to_hbm [thread:$0]  %s454, 1024, %s452, %s435, 128, 128, 8
        $region44: #{tpu_custom_call.1} parent=31 // pred_fallthru
          _
        // Predicated region
        $region45: #{tpu_custom_call.1} parent=31 // pred_check
          %p460 = pneg %p138
        $region46: #{tpu_custom_call.1} parent=31 // pred_check_branch
          %462 = sbr.rel (%p460) target = $region48
        $region47: #{tpu_custom_call.1} parent=31 // pred_region
          %s463 = smul.u32 8, %s26
          %s465 = ssub.s32 1024, 1024
          %466 = vsyncadd %s440, %s465
          %s467 = smul.addr %s463, 128
          %s468 = scalar_lea.hbm %s4, %s467
          %s469 = sshll.u32 %s443, 4
          %s470 = int_to_ptr.vmem [resolvable:$true] %s469
          %475 = dma.vmem_to_hbm [thread:$0]  %s470, 1024, %s468, %s440, 128, 128, 8
        $region48: #{tpu_custom_call.1} parent=31 // pred_fallthru
          _
      $region32: #{tpu_custom_call.1} parent=5 // pred_fallthru
        _
      %p476 = scmp.le.s32.totalorder 2, %s21
      // Predicated region
      $region49: #{tpu_custom_call.1} parent=5 // pred_check
        %p477 = pneg %p476
      $region50: #{tpu_custom_call.1} parent=5 // pred_check_branch
        %479 = sbr.rel (%p477) target = $region52
      $region51: #{tpu_custom_call.1} parent=5 // pred_region
        %s480 = ssub.s32 %s21, 2
        // Predicated region
        $region53: #{tpu_custom_call.1} parent=51 // pred_check
          %p481 = pneg %p118
        $region54: #{tpu_custom_call.1} parent=51 // pred_check_branch
          %483 = sbr.rel (%p481) target = $region56
        $region55: #{tpu_custom_call.1} parent=51 // pred_region
          %s484 = sand.u32 %s103, 1
          %s485 = scalar_lea.sflag [#allocation4], %s484
          %s486 = sand.u32 %s103, 1
          %s487 = smul.addr %s486, 64
          %s488 = scalar_lea.vmem [#allocation7], %s487
          %489 = dma.done %s485, 1024
        $region56: #{tpu_custom_call.1} parent=51 // pred_fallthru
          _
        // Predicated region
        $region57: #{tpu_custom_call.1} parent=51 // pred_check
          %p490 = pneg %p144
        $region58: #{tpu_custom_call.1} parent=51 // pred_check_branch
          %492 = sbr.rel (%p490) target = $region60
        $region59: #{tpu_custom_call.1} parent=51 // pred_region
          %s493 = sand.u32 %s129, 1
          %s494 = scalar_lea.sflag [#allocation9], %s493
          %s495 = sand.u32 %s129, 1
          %s496 = smul.addr %s495, 64
          %s497 = scalar_lea.vmem [#allocation8], %s496
          %498 = dma.done %s494, 1024
        $region60: #{tpu_custom_call.1} parent=51 // pred_fallthru
          _
      $region52: #{tpu_custom_call.1} parent=5 // pred_fallthru
        _
    $region6: #{tpu_custom_call.1} parent=1 // loop_footer
      %s25 = sadd.s32 1, %s21
    $region7: #{tpu_custom_call.1} parent=1 // loop_footer_branch
      %20 = sbr.rel target = $region3
    $region8: #{tpu_custom_call.1} parent=1 // loop_exit
      _
    %499 = vsyncpa [#allocation3], 1
    %s500 = scalar_lea.sflag [#allocation3], 1
    %501 = vsyncpa %s500, 1
    %502 = vsyncpa [#allocation6], 1
    %503 = vsyncpa [#allocation4], 1
    %s504 = scalar_lea.sflag [#allocation4], 1
    %505 = vsyncpa %s504, 1
    %506 = vsyncpa [#allocation9], 1
    %s507 = scalar_lea.sflag [#allocation9], 1
    %508 = vsyncpa %s507, 1

</llo_original>
